<compile_context>
chip_gen: v5e
topology: v5e:2x2
jax: 0.10.0
libtpu: 0.0.40
codegen_flags: <defaults>
</compile_context>

<pallas_src>
import math
import jax
import jax.numpy as jnp
from jax import lax
from jax.experimental import pallas as pl
from jax.experimental.pallas import tpu as pltpu

HID1 = 128        # first hidden width (lane-aligned)
HID2 = 64         # second hidden width (zero-padded to 128 in the wrapper)
HID2_PAD = 128
LANE = 128
CHUNK = 128       # in-kernel sub-tile: keeps h1/h2 inside the 64x4KiB vreg file


def _round_up(x, m):
    return ((x + m - 1) // m) * m


def _tpu_generation():
    """Best-effort generation info: (scoped-vmem budget bytes, is_v5e)."""
    kind = ""
    try:
        kind = jax.devices()[0].device_kind.lower()
    except Exception:
        pass
    is_v7 = "v7" in kind
    is_v5e = ("v5e" in kind) or ("v5 lite" in kind) or ("v5lite" in kind)
    try:
        phys = int(pltpu.get_tpu_info().vmem_capacity_bytes)
    except Exception:
        phys = (64 if is_v7 else 128) * 1024 * 1024
    # v7x: stay under the 64 MiB/TC physical ceiling (~48 MiB scoped).
    # v5e/v6e: go well above the 16/32 MiB defaults (128 MiB physical).
    vmem_limit = min((phys * 3) // 4, 96 * 1024 * 1024)
    return vmem_limit, is_v5e


def _mlp_kernel(x_ref, w1_ref, b1_ref, w2_ref, b2_ref, w3_ref, b3_ref, o_ref):
    """One batch tile: (tile_b, in) -> lane-dense (1, n_chunks, CHUNK) value slab."""
    mxu_dtype = w1_ref.dtype
    b3 = b3_ref[0, 0]                 # final-layer bias scalar (SMEM)
    n_chunks = o_ref.shape[1]         # static: tile_b // CHUNK

    def body(c, carry):
        r0 = pl.multiple_of(c * CHUNK, CHUNK)
        # In-kernel cast (free VPU op): x streams from HBM in its original dtype,
        # no extra wrapper-side astype pass over the dominant stream.
        x = x_ref[pl.ds(r0, CHUNK), :].astype(mxu_dtype)
        # Layer 1: (CHUNK, in) @ (in, 128) -- single-pass bf16 MXU, f32 accumulation.
        h1 = jnp.dot(x, w1_ref[...], preferred_element_type=jnp.float32) + b1_ref[...]
        h1 = jnp.maximum(h1, 0.0).astype(mxu_dtype)
        # Layer 2: (CHUNK, 128) @ (128, 128); hidden width zero-padded 64->128 so
        # the MXU pass and elementwise ops below use full-lane, unmasked vregs.
        h2 = jnp.dot(h1, w2_ref[...], preferred_element_type=jnp.float32) + b2_ref[...]
        h2 = jnp.maximum(h2, 0.0)
        # Layer 3 (out_features == 1): VPU multiply + XLU lane-reduce instead of an
        # N=1 MXU matmul; padded w3 lanes are zero so they contribute nothing.
        col = jnp.sum(h2 * w3_ref[...], axis=-1, keepdims=True) + b3   # (CHUNK, 1)
        # Lane-dense per-chunk store into the (1, n_chunks, CHUNK) output slab.
        o_ref[0, pl.ds(c, 1), :] = jnp.transpose(col).astype(o_ref.dtype)
        return carry

    lax.fori_loop(0, n_chunks, body, 0, unroll=min(8, n_chunks))


def value_network_forward(x, params, *, tile_b=None, mxu_dtype=jnp.bfloat16,
                          core_parallel_batch=False):
    """x: (B, input_size) float32 (or bfloat16).  params: w1 (in,128), b1 (1,128),
    w2 (128,64), b2 (1,64), w3 (64,1), b3 (1,1).  Returns (B, 1) float32."""
    B, in_size = x.shape
    vmem_limit, is_v5e = _tpu_generation()

    # --- batch tiling --------------------------------------------------------
    if tile_b is None:
        # Large tiles amortize the per-grid-step overhead and push the x stream to
        # the HBM roofline. Budget ~half the scoped VMEM for the streamed buffers
        # (x double/triple-buffer + out double-buffer); weights/intermediates are
        # tiny and covered by the remaining headroom.
        nbuf_x = 3 if is_v5e else 2
        x_bytes = jnp.dtype(x.dtype).itemsize
        per_row = nbuf_x * in_size * x_bytes + 2 * 4
        tile_b = min(8192, max(CHUNK, (vmem_limit // 2 // per_row) // CHUNK * CHUNK))
    tile_b = _round_up(min(tile_b, _round_up(B, CHUNK)), CHUNK)
    n_chunks = tile_b // CHUNK
    num_tiles = pl.cdiv(B, tile_b)
    # NOTE: no wrapper-side jnp.pad of x (that would be a full extra HBM pass).
    # The last (partial) tile reads undefined rows past the end of x; those rows
    # only feed their own output lanes, which are dropped by the [:B] slice below.

    # --- resident weights (tiny; one-time prep; padding 64->128 is exact) ----
    w1 = params["w1"].astype(mxu_dtype)                                              # (in, 128)
    b1 = params["b1"].astype(jnp.float32)                                            # (1, 128)
    w2 = jnp.pad(params["w2"], ((0, 0), (0, HID2_PAD - HID2))).astype(mxu_dtype)     # (128, 128)
    b2 = jnp.pad(params["b2"], ((0, 0), (0, HID2_PAD - HID2))).astype(jnp.float32)   # (1, 128)
    w3 = jnp.pad(params["w3"].T, ((0, 0), (0, HID2_PAD - HID2))).astype(jnp.float32) # (1, 128)
    b3 = params["b3"].astype(jnp.float32)                                            # (1, 1) -> SMEM

    const = lambda i: (0, 0)   # resident operands: DMA'd once, never re-fetched
    x_spec_kwargs = {}
    if is_v5e:
        # v5e: deeper x pipeline hides DMA-issue latency at tile boundaries.
        x_spec_kwargs["pipeline_mode"] = pl.Buffered(3)
    in_specs = [
        pl.BlockSpec((tile_b, in_size), lambda i: (i, 0), **x_spec_kwargs),
        pl.BlockSpec((in_size, HID1), const),
        pl.BlockSpec((1, HID1), const),
        pl.BlockSpec((HID1, HID2_PAD), const),
        pl.BlockSpec((1, HID2_PAD), const),
        pl.BlockSpec((1, HID2_PAD), const),
        pl.BlockSpec(memory_space=pltpu.MemorySpace.SMEM),   # b3 scalar
    ]
    out_specs = pl.BlockSpec((1, n_chunks, CHUNK), lambda i: (i, 0, 0))
    out_shape = jax.ShapeDtypeStruct((num_tiles, n_chunks, CHUNK), jnp.float32)

    # TODO(synk): on v7x, verify the batch grid is actually sharded across both
    # TensorCores; if not, call with core_parallel_batch=True (no-op question on
    # v5e/v6e, which have a single TC).
    dim_sem = (pltpu.CORE_PARALLEL,) if core_parallel_batch else ("parallel",)

    x_bytes = jnp.dtype(x.dtype).itemsize
    flops = 2 * num_tiles * tile_b * (in_size * HID1 + HID1 * HID2_PAD + HID2_PAD)
    bytes_accessed = (num_tiles * tile_b * (in_size * x_bytes + 4)
                      + w1.size * jnp.dtype(mxu_dtype).itemsize
                      + w2.size * jnp.dtype(mxu_dtype).itemsize
                      + (b1.size + b2.size + w3.size + b3.size) * 4)

    out = pl.pallas_call(
        _mlp_kernel,
        out_shape=out_shape,
        grid=(num_tiles,),
        in_specs=in_specs,
        out_specs=out_specs,
        compiler_params=pltpu.CompilerParams(
            dimension_semantics=dim_sem,
            vmem_limit_bytes=vmem_limit,
        ),
        cost_estimate=pl.CostEstimate(
            flops=flops, transcendentals=0, bytes_accessed=bytes_accessed),
    )(x, w1, b1, w2, b2, w3, b3)

    # (num_tiles, n_chunks, CHUNK) lane-dense slabs -> (B, 1), dropping tail rows.
    return out.reshape(num_tiles * tile_b, 1)[:B]


def init_value_network_params(key, input_size):
    """PyTorch-style init: U(-1/sqrt(fan_in), 1/sqrt(fan_in)).
    Weights stored as (in_features, out_features); biases as (1, out)."""
    sizes = [(input_size, HID1), (HID1, HID2), (HID2, 1)]
    params = {}
    for i, (fin, fout) in enumerate(sizes, start=1):
        key, kw, kb = jax.random.split(key, 3)
        bound = 1.0 / math.sqrt(fin)
        params[f"w{i}"] = jax.random.uniform(
            kw, (fin, fout), jnp.float32, minval=-bound, maxval=bound)
        params[f"b{i}"] = jax.random.uniform(
            kb, (1, fout), jnp.float32, minval=-bound, maxval=bound)
    return params


def value_network_ref(x, params):
    """Plain-JAX reference (same math as the PyTorch module)."""
    h1 = jnp.maximum(x @ params["w1"] + params["b1"], 0.0)
    h2 = jnp.maximum(h1 @ params["w2"] + params["b2"], 0.0)
    return h2 @ params["w3"] + params["b3"]


if __name__ == "__main__":
    key = jax.random.PRNGKey(0)
    B, input_size = 2, 32
    key, kx = jax.random.split(key)
    x = jax.random.normal(kx, (B, input_size), jnp.float32)
    params = init_value_network_params(key, input_size)

    out = jax.block_until_ready(value_network_forward(x, params))
    ref = value_network_ref(x, params)
    assert out.shape == (B, 1), out.shape
    # Tolerance covers bf16 MXU operands (f32 accumulation) in the kernel vs. the
    # XLA default-precision f32 reference.
    assert jnp.allclose(out, ref, atol=2e-2, rtol=2e-2), (out, ref)

    # Multi-tile + ragged batch (exercises grid > 1 and the unpadded tail tile).
    key, kx2 = jax.random.split(key)
    x2 = jax.random.normal(kx2, (300, input_size), jnp.float32)
    out2 = jax.block_until_ready(value_network_forward(x2, params, tile_b=256))
    ref2 = value_network_ref(x2, params)
    assert out2.shape == (300, 1), out2.shape
    assert jnp.allclose(out2, ref2, atol=2e-2, rtol=2e-2)

    print("KERNEL_OK")
</pallas_src>

<mosaic_0001>
module attributes {stable_mosaic.version = 11 : i64} {
  func.func @_mlp_kernel(%arg0: i32, %arg1: memref<128x32xf32, #tpu.memory_space<vmem>>, %arg2: memref<32x128xbf16, #tpu.memory_space<vmem>>, %arg3: memref<1x128xf32, #tpu.memory_space<vmem>>, %arg4: memref<128x128xbf16, #tpu.memory_space<vmem>>, %arg5: memref<1x128xf32, #tpu.memory_space<vmem>>, %arg6: memref<1x128xf32, #tpu.memory_space<vmem>>, %arg7: memref<1x1xf32, #tpu.memory_space<smem>>, %arg8: memref<1x1x128xf32, #tpu.memory_space<vmem>>) attributes {dimension_semantics = [#tpu.dimension_semantics<parallel>], iteration_bounds = array<i64: 1>, scalar_prefetch = 0 : i64, scratch_operands = 0 : i64, tpu.core_type = #tpu.core_type<tc>, window_params = [{transform_indices = @transform_0, window_bounds = array<i64: 128, 32>}, {pipeline_mode = #tpu.pipeline_mode<synchronous>, transform_indices = @transform_1, window_bounds = array<i64: 32, 128>}, {pipeline_mode = #tpu.pipeline_mode<synchronous>, transform_indices = @transform_2, window_bounds = array<i64: 1, 128>}, {pipeline_mode = #tpu.pipeline_mode<synchronous>, transform_indices = @transform_3, window_bounds = array<i64: 128, 128>}, {pipeline_mode = #tpu.pipeline_mode<synchronous>, transform_indices = @transform_4, window_bounds = array<i64: 1, 128>}, {pipeline_mode = #tpu.pipeline_mode<synchronous>, transform_indices = @transform_5, window_bounds = array<i64: 1, 128>}, {transform_indices = @transform_6, window_bounds = array<i64: 1, 1>}, {transform_indices = @transform_7, window_bounds = array<i64: 1, 1, 128>}]} {
    %c0 = arith.constant 0 : index
    %c0_0 = arith.constant 0 : index
    %0 = memref.load %arg7[%c0, %c0_0] : memref<1x1xf32, #tpu.memory_space<smem>>
    %c0_i32 = arith.constant 0 : i32
    %c128_i32 = arith.constant 128 : i32
    %1 = arith.muli %c0_i32, %c128_i32 : i32
    %2 = tpu.assume_multiple %1, 128 : i32
    %3 = arith.index_cast %2 : i32 to index
    %c0_1 = arith.constant 0 : index
    %4 = vector.load %arg1[%3, %c0_1] : memref<128x32xf32, #tpu.memory_space<vmem>>, vector<128x32xf32>
    %5 = arith.truncf %4 : vector<128x32xf32> to vector<128x32xbf16>
    %c0_2 = arith.constant 0 : index
    %c0_3 = arith.constant 0 : index
    %6 = vector.load %arg2[%c0_2, %c0_3] : memref<32x128xbf16, #tpu.memory_space<vmem>>, vector<32x128xbf16>
    %cst = arith.constant dense<0.000000e+00> : vector<128x128xf32>
    %7 = tpu.matmul %5, %6, %cst {dimension_numbers = #tpu.dot_dimension_numbers<[1], [0], [0], [1], [0, 0, 1, 1], [], []>} : vector<128x32xbf16>, vector<32x128xbf16>, vector<128x128xf32> -> vector<128x128xf32>
    %c0_4 = arith.constant 0 : index
    %c0_5 = arith.constant 0 : index
    %8 = vector.load %arg3[%c0_4, %c0_5] : memref<1x128xf32, #tpu.memory_space<vmem>>, vector<1x128xf32>
    %9 = vector.broadcast %8 : vector<1x128xf32> to vector<128x128xf32>
    %10 = arith.addf %7, %9 : vector<128x128xf32>
    %cst_6 = arith.constant 0.000000e+00 : f32
    %11 = vector.broadcast %cst_6 : f32 to vector<128x128xf32>
    %12 = arith.maximumf %10, %11 : vector<128x128xf32>
    %13 = arith.truncf %12 : vector<128x128xf32> to vector<128x128xbf16>
    %c0_7 = arith.constant 0 : index
    %c0_8 = arith.constant 0 : index
    %14 = vector.load %arg4[%c0_7, %c0_8] : memref<128x128xbf16, #tpu.memory_space<vmem>>, vector<128x128xbf16>
    %cst_9 = arith.constant dense<0.000000e+00> : vector<128x128xf32>
    %15 = tpu.matmul %13, %14, %cst_9 {dimension_numbers = #tpu.dot_dimension_numbers<[1], [0], [0], [1], [0, 0, 1, 1], [], []>} : vector<128x128xbf16>, vector<128x128xbf16>, vector<128x128xf32> -> vector<128x128xf32>
    %c0_10 = arith.constant 0 : index
    %c0_11 = arith.constant 0 : index
    %16 = vector.load %arg5[%c0_10, %c0_11] : memref<1x128xf32, #tpu.memory_space<vmem>>, vector<1x128xf32>
    %17 = vector.broadcast %16 : vector<1x128xf32> to vector<128x128xf32>
    %18 = arith.addf %15, %17 : vector<128x128xf32>
    %cst_12 = arith.constant 0.000000e+00 : f32
    %19 = vector.broadcast %cst_12 : f32 to vector<128x128xf32>
    %20 = arith.maximumf %18, %19 : vector<128x128xf32>
    %c0_13 = arith.constant 0 : index
    %c0_14 = arith.constant 0 : index
    %21 = vector.load %arg6[%c0_13, %c0_14] : memref<1x128xf32, #tpu.memory_space<vmem>>, vector<1x128xf32>
    %22 = vector.broadcast %21 : vector<1x128xf32> to vector<128x128xf32>
    %23 = arith.mulf %20, %22 : vector<128x128xf32>
    %cst_15 = arith.constant dense<0.000000e+00> : vector<128xf32>
    %24 = vector.multi_reduction <add>, %23, %cst_15 [1] : vector<128x128xf32> to vector<128xf32>
    %25 = vector.shape_cast %24 : vector<128xf32> to vector<128x1xf32>
    %26 = vector.broadcast %0 : f32 to vector<128x1xf32>
    %27 = arith.addf %25, %26 : vector<128x1xf32>
    %28 = tpu.transpose %27, [1, 0] : vector<128x1xf32> -> vector<1x128xf32>
    %c0_16 = arith.constant 0 : index
    %29 = arith.index_cast %c0_i32 : i32 to index
    %c0_17 = arith.constant 0 : index
    %30 = vector.load %arg8[%c0_16, %29, %c0_17] : memref<1x1x128xf32, #tpu.memory_space<vmem>>, vector<1x1x128xf32>
    %31 = vector.shape_cast %30 : vector<1x1x128xf32> to vector<1x128xf32>
    %32 = vector.shape_cast %28 : vector<1x128xf32> to vector<1x1x128xf32>
    tpu.vector_store %arg8[%c0_16, %29, %c0_17], %32 {strides = array<i32>} : memref<1x1x128xf32, #tpu.memory_space<vmem>>, vector<1x1x128xf32>,
    %c1_i32 = arith.constant 1 : i32
    return
  }
  func.func @transform_0(%arg0: i32) -> (i32, i32) {
    %c0_i32 = arith.constant 0 : i32
    %c0_i32_0 = arith.constant 0 : i32
    return %arg0, %c0_i32 : i32, i32
  }
  func.func @transform_1(%arg0: i32) -> (i32, i32) {
    %c0_i32 = arith.constant 0 : i32
    %c0_i32_0 = arith.constant 0 : i32
    %c0_i32_1 = arith.constant 0 : i32
    return %c0_i32, %c0_i32_0 : i32, i32
  }
  func.func @transform_2(%arg0: i32) -> (i32, i32) {
    %c0_i32 = arith.constant 0 : i32
    %c0_i32_0 = arith.constant 0 : i32
    %c0_i32_1 = arith.constant 0 : i32
    return %c0_i32, %c0_i32_0 : i32, i32
  }
  func.func @transform_3(%arg0: i32) -> (i32, i32) {
    %c0_i32 = arith.constant 0 : i32
    %c0_i32_0 = arith.constant 0 : i32
    %c0_i32_1 = arith.constant 0 : i32
    return %c0_i32, %c0_i32_0 : i32, i32
  }
  func.func @transform_4(%arg0: i32) -> (i32, i32) {
    %c0_i32 = arith.constant 0 : i32
    %c0_i32_0 = arith.constant 0 : i32
    %c0_i32_1 = arith.constant 0 : i32
    return %c0_i32, %c0_i32_0 : i32, i32
  }
  func.func @transform_5(%arg0: i32) -> (i32, i32) {
    %c0_i32 = arith.constant 0 : i32
    %c0_i32_0 = arith.constant 0 : i32
    %c0_i32_1 = arith.constant 0 : i32
    return %c0_i32, %c0_i32_0 : i32, i32
  }
  func.func @transform_6(%arg0: i32) -> (i32, i32) {
    %c0_i32 = arith.constant 0 : i32
    %c0_i32_0 = arith.constant 0 : i32
    %c0_i32_1 = arith.constant 0 : i32
    return %c0_i32, %c0_i32_0 : i32, i32
  }
  func.func @transform_7(%arg0: i32) -> (i32, i32, i32) {
    %c0_i32 = arith.constant 0 : i32
    %c0_i32_0 = arith.constant 0 : i32
    %c0_i32_1 = arith.constant 0 : i32
    return %arg0, %c0_i32, %c0_i32_0 : i32, i32, i32
  }
}

</mosaic_0001>

<llo_original>
// kernel: tpu_custom_call.1
$region0: #{tpu_custom_call.1}
  #allocation0 [shape = 'u32[]', space=smem, size = 0x4, offset = 0x4, fixed_abs, tag = 'smem constant byte address 0x4 - core index']
  #allocation1 [shape = 'u32[72,128]{1,0:T(1,128)}', space=vmem, size = 0x9000, scoped, tag = 'internal scratch']
  #allocation2 [shape = 'f32[1,1]{1,0:T(1,128)S(6)}', space=smem, size = 0x200, scoped, tag = 'scoped memory for tpu_custom_call.1']
  %s0 = inlined_call_operand.vmem [shape: f32[2,32], index: 0, kind: input, shape index: {}]
  %s1 = inlined_call_operand.hbm [shape: bf16[32,128], index: 1, kind: input, shape index: {}]
  %s2 = inlined_call_operand.vmem [shape: f32[1,128], index: 2, kind: input, shape index: {}]
  %s3 = inlined_call_operand.hbm [shape: bf16[128,128], index: 3, kind: input, shape index: {}]
  %s4 = inlined_call_operand.vmem [shape: f32[1,128], index: 4, kind: input, shape index: {}]
  %s5 = inlined_call_operand.vmem [shape: f32[1,128], index: 5, kind: input, shape index: {}]
  %s6 = inlined_call_operand.<no memory space> [shape: f32[1,1], index: 6, kind: input, shape index: {}]
  %s7 = inlined_call_operand.hbm [shape: f32[1,1,128], index: 7, kind: output, shape index: {}]
  %s8 = sld [smem:[#allocation0]]
  $region46: #{tpu_custom_call.1} parent=0
    _
  %s10 = ssub.s32 1, %s8
  %s11 = scalar_select 0, %s10, %s8
  %12 = sst [smem:[#allocation2]] %s6
  $region1: #{tpu_custom_call.1} parent=0
    #allocation3 [shape = 'u8[8192]{0}', space=vmem, size = 0x2000, scoped, tag = 'input window, operand 1, single buffered']
    #allocation4 [shape = 's32[1]{0}', space=sflag, size = 0x4, scoped, tag = 'scoped memory for tpu_custom_call.1']
    #allocation5 [shape = 's32[1]{0}', space=sflag, size = 0x4, scoped, tag = 'scoped memory for tpu_custom_call.1']
    #allocation6 [shape = 'u8[32768]{0}', space=vmem, size = 0x8000, scoped, tag = 'input window, operand 3, single buffered']
    #allocation7 [shape = 's32[1]{0}', space=sflag, size = 0x4, scoped, tag = 'scoped memory for tpu_custom_call.1']
    #allocation8 [shape = 'u8[512]{0}', space=vmem, size = 0x400, scoped, tag = 'output window, operand 0, single buffered']
    %13 = vsyncpa [#allocation4], 0
    %14 = vsyncpa [#allocation7], 0
    %15 = vsyncpa [#allocation5], 0
    // Predicated region
    $region2: #{tpu_custom_call.1} parent=1 // pred_check
      _
    $region3: #{tpu_custom_call.1} parent=1 // pred_check_branch
      %17 = sbr.rel (0) target = $region5
    $region4: #{tpu_custom_call.1} parent=1 // pred_region
      _
    $region5: #{tpu_custom_call.1} parent=1 // pred_fallthru
      _
    // Predicated region
    $region6: #{tpu_custom_call.1} parent=1 // pred_check
      _
    $region7: #{tpu_custom_call.1} parent=1 // pred_check_branch
      %19 = sbr.rel (0) target = $region9
    $region8: #{tpu_custom_call.1} parent=1 // pred_region
      %21 = vsyncadd [#allocation4], 0
      %s22 = sshll.u32 %s1, 4
      %s23 = int_to_ptr.hbm [resolvable:$true] %s22
      %s24 = sshll.u32 [#allocation3], 4
      %s25 = int_to_ptr.vmem [resolvable:$true] %s24
      %30 = dma.hbm_to_vmem [thread:$0]  %s23, 256, %s25, [#allocation4], 64, 64, 4
    $region9: #{tpu_custom_call.1} parent=1 // pred_fallthru
      _
    // Predicated region
    $region10: #{tpu_custom_call.1} parent=1 // pred_check
      _
    $region11: #{tpu_custom_call.1} parent=1 // pred_check_branch
      %32 = sbr.rel (0) target = $region13
    $region12: #{tpu_custom_call.1} parent=1 // pred_region
      _
    $region13: #{tpu_custom_call.1} parent=1 // pred_fallthru
      _
    // Predicated region
    $region14: #{tpu_custom_call.1} parent=1 // pred_check
      _
    $region15: #{tpu_custom_call.1} parent=1 // pred_check_branch
      %34 = sbr.rel (0) target = $region17
    $region16: #{tpu_custom_call.1} parent=1 // pred_region
      %36 = vsyncadd [#allocation7], 0
      %s37 = sshll.u32 %s3, 4
      %s38 = int_to_ptr.hbm [resolvable:$true] %s37
      %s39 = sshll.u32 [#allocation6], 4
      %s40 = int_to_ptr.vmem [resolvable:$true] %s39
      %45 = dma.hbm_to_vmem [thread:$0]  %s38, 1024, %s40, [#allocation7], 64, 64, 4
    $region17: #{tpu_custom_call.1} parent=1 // pred_fallthru
      _
    // Predicated region
    $region18: #{tpu_custom_call.1} parent=1 // pred_check
      _
    $region19: #{tpu_custom_call.1} parent=1 // pred_check_branch
      %47 = sbr.rel (0) target = $region21
    $region20: #{tpu_custom_call.1} parent=1 // pred_region
      _
    $region21: #{tpu_custom_call.1} parent=1 // pred_fallthru
      _
    // Predicated region
    $region22: #{tpu_custom_call.1} parent=1 // pred_check
      _
    $region23: #{tpu_custom_call.1} parent=1 // pred_check_branch
      %49 = sbr.rel (0) target = $region25
    $region24: #{tpu_custom_call.1} parent=1 // pred_region
      _
    $region25: #{tpu_custom_call.1} parent=1 // pred_fallthru
      _
    // Predicated region
    $region26: #{tpu_custom_call.1} parent=1 // pred_check
      _
    $region27: #{tpu_custom_call.1} parent=1 // pred_check_branch
      %51 = sbr.rel (0) target = $region29
    $region28: #{tpu_custom_call.1} parent=1 // pred_region
      _
    $region29: #{tpu_custom_call.1} parent=1 // pred_fallthru
      _
    // Predicated region
    $region30: #{tpu_custom_call.1} parent=1 // pred_check
      _
    $region31: #{tpu_custom_call.1} parent=1 // pred_check_branch
      %53 = sbr.rel (0) target = $region33
    $region32: #{tpu_custom_call.1} parent=1 // pred_region
      %55 = dma.done [#allocation4], 256
    $region33: #{tpu_custom_call.1} parent=1 // pred_fallthru
      _
    // Predicated region
    $region34: #{tpu_custom_call.1} parent=1 // pred_check
      _
    $region35: #{tpu_custom_call.1} parent=1 // pred_check_branch
      %57 = sbr.rel (0) target = $region37
    $region36: #{tpu_custom_call.1} parent=1 // pred_region
      %59 = dma.done [#allocation7], 1024
    $region37: #{tpu_custom_call.1} parent=1 // pred_fallthru
      _
    %s61 = sld [smem:[#allocation2]]
    %v62 = vld [vmem:[%s0] sm:$0xff]
    %v63 = vld [vmem:[%s0 + $0x8] sm:$0xff]
    %v64 = vld [vmem:[%s0 + $0x10] sm:$0xff]
    %v65 = vld [vmem:[%s0 + $0x18] sm:$0xff]
    %v66 = vld [vmem:[%s0 + $0x20] sm:$0xff]
    %v67 = vld [vmem:[%s0 + $0x28] sm:$0xff]
    %v68 = vld [vmem:[%s0 + $0x30] sm:$0xff]
    %v69 = vld [vmem:[%s0 + $0x38] sm:$0xff]
    %v70 = vld [vmem:[%s0 + $0x40] sm:$0xff]
    %v71 = vld [vmem:[%s0 + $0x48] sm:$0xff]
    %v72 = vld [vmem:[%s0 + $0x50] sm:$0xff]
    %v73 = vld [vmem:[%s0 + $0x58] sm:$0xff]
    %v74 = vld [vmem:[%s0 + $0x60] sm:$0xff]
    %v75 = vld [vmem:[%s0 + $0x68] sm:$0xff]
    %v76 = vld [vmem:[%s0 + $0x70] sm:$0xff]
    %v77 = vld [vmem:[%s0 + $0x78] sm:$0xff]
    %v78 = vpack.c.bf16 %v63, %v62
    %v79 = vpack.c.bf16 %v65, %v64
    %v80 = vpack.c.bf16 %v67, %v66
    %v81 = vpack.c.bf16 %v69, %v68
    %v82 = vpack.c.bf16 %v71, %v70
    %v83 = vpack.c.bf16 %v73, %v72
    %v84 = vpack.c.bf16 %v75, %v74
    %v85 = vpack.c.bf16 %v77, %v76
    %v86 = vld [vmem:[#allocation3] sm:$0xf]
    %v87 = vld [vmem:[#allocation3 + $0x4] sm:$0xf]
    %v88 = vld [vmem:[#allocation3 + $0x8] sm:$0xf]
    %v89 = vld [vmem:[#allocation3 + $0xc] sm:$0xf]
    %v90 = vld [vmem:[%s2] sm:$0x1]
    %v92 = vperm.slane %v90, 0
    %v98 = vunpack.c.l.b16 %v86
    %v99 = vunpack.c.l.b16 %v87
    %v100 = vunpack.c.l.b16 %v88
    %v101 = vunpack.c.l.b16 %v89
    %v102 = vpack.c.b16 %v99, %v98
    %v103 = vpack.c.b16 %v101, %v100
    %vm106 = vcmask 261120
    %v108 = vsel %vm106, %v78, 0
    %v111 = vsel %vm106, %v79, 0
    %v114 = vsel %vm106, %v80, 0
    %v117 = vsel %vm106, %v81, 0
    %v120 = vsel %vm106, %v82, 0
    %v123 = vsel %vm106, %v83, 0
    %v126 = vsel %vm106, %v84, 0
    %v129 = vsel %vm106, %v85, 0
    %131 = vmatpush.bf16.msra.mxu0 0
    %132 = vmatpush.bf16.msra.mxu0 0
    %133 = vmatpush.bf16.msra.mxu0 0
    %134 = vmatpush.bf16.msra.mxu0 0
    %135 = vmatpush.bf16.msra.mxu0 0
    %136 = vmatpush.bf16.msra.mxu0 0
    %137 = vmatpush.bf16.msra.mxu0 %v103
    %138 = vmatpush.bf16.msra.mxu0 %v102
    %139 = vmatmul.bf16.gmra.mxu0 %v108
    %v140 = vpop.f32.mrf.mxu0
    %v141 = vadd.f32 %v92, %v140
    %v142 = vpop.f32.mrf.mxu0
    %v143 = vadd.f32 %v92, %v142
    %144 = vmatmul.bf16.gmra.mxu0 %v111
    %v145 = vpop.f32.mrf.mxu0
    %v146 = vadd.f32 %v92, %v145
    %v147 = vpop.f32.mrf.mxu0
    %v148 = vadd.f32 %v92, %v147
    %149 = vmatmul.bf16.gmra.mxu0 %v114
    %v150 = vpop.f32.mrf.mxu0
    %v151 = vadd.f32 %v92, %v150
    %v152 = vpop.f32.mrf.mxu0
    %v153 = vadd.f32 %v92, %v152
    %154 = vmatmul.bf16.gmra.mxu0 %v117
    %v155 = vpop.f32.mrf.mxu0
    %v156 = vadd.f32 %v92, %v155
    %v157 = vpop.f32.mrf.mxu0
    %v158 = vadd.f32 %v92, %v157
    %159 = vmatmul.bf16.gmra.mxu0 %v120
    %v160 = vpop.f32.mrf.mxu0
    %v161 = vadd.f32 %v92, %v160
    %v162 = vpop.f32.mrf.mxu0
    %v163 = vadd.f32 %v92, %v162
    %164 = vmatmul.bf16.gmra.mxu0 %v123
    %v165 = vpop.f32.mrf.mxu0
    %v166 = vadd.f32 %v92, %v165
    %v167 = vpop.f32.mrf.mxu0
    %v168 = vadd.f32 %v92, %v167
    %169 = vmatmul.bf16.gmra.mxu0 %v126
    %v170 = vpop.f32.mrf.mxu0
    %v171 = vadd.f32 %v92, %v170
    %v172 = vpop.f32.mrf.mxu0
    %v173 = vadd.f32 %v92, %v172
    %174 = vmatmul.bf16.gmra.mxu0 %v129
    %v175 = vpop.f32.mrf.mxu0
    %v176 = vadd.f32 %v92, %v175
    %v177 = vpop.f32.mrf.mxu0
    %v178 = vadd.f32 %v92, %v177
    %179 = vdwg.mxu0
    %v180 = vmax.f32 %v141, 0.0
    %v181 = vmax.f32 %v143, 0.0
    %v182 = vmax.f32 %v146, 0.0
    %v183 = vmax.f32 %v148, 0.0
    %v184 = vmax.f32 %v151, 0.0
    %v185 = vmax.f32 %v153, 0.0
    %v186 = vmax.f32 %v156, 0.0
    %v187 = vmax.f32 %v158, 0.0
    %v188 = vmax.f32 %v161, 0.0
    %v189 = vmax.f32 %v163, 0.0
    %v190 = vmax.f32 %v166, 0.0
    %v191 = vmax.f32 %v168, 0.0
    %v192 = vmax.f32 %v171, 0.0
    %v193 = vmax.f32 %v173, 0.0
    %v194 = vmax.f32 %v176, 0.0
    %v195 = vmax.f32 %v178, 0.0
    %v196 = vpack.c.bf16 %v181, %v180
    %v197 = vpack.c.bf16 %v183, %v182
    %v198 = vpack.c.bf16 %v185, %v184
    %v199 = vpack.c.bf16 %v187, %v186
    %v200 = vpack.c.bf16 %v189, %v188
    %v201 = vpack.c.bf16 %v191, %v190
    %v202 = vpack.c.bf16 %v193, %v192
    %v203 = vpack.c.bf16 %v195, %v194
    %v204 = vld [vmem:[#allocation6] sm:$0xf]
    %v205 = vld [vmem:[#allocation6 + $0x4] sm:$0xf]
    %v206 = vld [vmem:[#allocation6 + $0x8] sm:$0xf]
    %v207 = vld [vmem:[#allocation6 + $0xc] sm:$0xf]
    %v208 = vld [vmem:[#allocation6 + $0x10] sm:$0xf]
    %v209 = vld [vmem:[#allocation6 + $0x14] sm:$0xf]
    %v210 = vld [vmem:[#allocation6 + $0x18] sm:$0xf]
    %v211 = vld [vmem:[#allocation6 + $0x1c] sm:$0xf]
    %v212 = vld [vmem:[#allocation6 + $0x20] sm:$0xf]
    %v213 = vld [vmem:[#allocation6 + $0x24] sm:$0xf]
    %v214 = vld [vmem:[#allocation6 + $0x28] sm:$0xf]
    %v215 = vld [vmem:[#allocation6 + $0x2c] sm:$0xf]
    %v216 = vld [vmem:[#allocation6 + $0x30] sm:$0xf]
    %v217 = vld [vmem:[#allocation6 + $0x34] sm:$0xf]
    %v218 = vld [vmem:[#allocation6 + $0x38] sm:$0xf]
    %v219 = vld [vmem:[#allocation6 + $0x3c] sm:$0xf]
    %v220 = vld [vmem:[%s4] sm:$0x1]
    %v222 = vperm.slane %v220, 0
    %v240 = vunpack.c.l.b16 %v204
    %v241 = vunpack.c.l.b16 %v205
    %v242 = vunpack.c.l.b16 %v206
    %v243 = vunpack.c.l.b16 %v207
    %v244 = vunpack.c.l.b16 %v208
    %v245 = vunpack.c.l.b16 %v209
    %v246 = vunpack.c.l.b16 %v210
    %v247 = vunpack.c.l.b16 %v211
    %v248 = vunpack.c.l.b16 %v212
    %v249 = vunpack.c.l.b16 %v213
    %v250 = vunpack.c.l.b16 %v214
    %v251 = vunpack.c.l.b16 %v215
    %v252 = vunpack.c.l.b16 %v216
    %v253 = vunpack.c.l.b16 %v217
    %v254 = vunpack.c.l.b16 %v218
    %v255 = vunpack.c.l.b16 %v219
    %v256 = vpack.c.b16 %v241, %v240
    %v257 = vpack.c.b16 %v243, %v242
    %v258 = vpack.c.b16 %v245, %v244
    %v259 = vpack.c.b16 %v247, %v246
    %v260 = vpack.c.b16 %v249, %v248
    %v261 = vpack.c.b16 %v251, %v250
    %v262 = vpack.c.b16 %v253, %v252
    %v263 = vpack.c.b16 %v255, %v254
    %272 = vmatpush.bf16.msra.mxu0 %v263
    %273 = vmatpush.bf16.msra.mxu0 %v262
    %274 = vmatpush.bf16.msra.mxu0 %v261
    %275 = vmatpush.bf16.msra.mxu0 %v260
    %276 = vmatpush.bf16.msra.mxu0 %v259
    %277 = vmatpush.bf16.msra.mxu0 %v258
    %278 = vmatpush.bf16.msra.mxu0 %v257
    %279 = vmatpush.bf16.msra.mxu0 %v256
    %280 = vmatmul.bf16.gmra.mxu0 %v196
    %v281 = vpop.f32.mrf.mxu0
    %v282 = vadd.f32 %v222, %v281
    %v283 = vpop.f32.mrf.mxu0
    %v284 = vadd.f32 %v222, %v283
    %285 = vmatmul.bf16.gmra.mxu0 %v197
    %v286 = vpop.f32.mrf.mxu0
    %v287 = vadd.f32 %v222, %v286
    %v288 = vpop.f32.mrf.mxu0
    %v289 = vadd.f32 %v222, %v288
    %290 = vmatmul.bf16.gmra.mxu0 %v198
    %v291 = vpop.f32.mrf.mxu0
    %v292 = vadd.f32 %v222, %v291
    %v293 = vpop.f32.mrf.mxu0
    %v294 = vadd.f32 %v222, %v293
    %295 = vmatmul.bf16.gmra.mxu0 %v199
    %v296 = vpop.f32.mrf.mxu0
    %v297 = vadd.f32 %v222, %v296
    %v298 = vpop.f32.mrf.mxu0
    %v299 = vadd.f32 %v222, %v298
    %300 = vmatmul.bf16.gmra.mxu0 %v200
    %v301 = vpop.f32.mrf.mxu0
    %v302 = vadd.f32 %v222, %v301
    %v303 = vpop.f32.mrf.mxu0
    %v304 = vadd.f32 %v222, %v303
    %305 = vmatmul.bf16.gmra.mxu0 %v201
    %v306 = vpop.f32.mrf.mxu0
    %v307 = vadd.f32 %v222, %v306
    %v308 = vpop.f32.mrf.mxu0
    %v309 = vadd.f32 %v222, %v308
    %310 = vmatmul.bf16.gmra.mxu0 %v202
    %v311 = vpop.f32.mrf.mxu0
    %v312 = vadd.f32 %v222, %v311
    %v313 = vpop.f32.mrf.mxu0
    %v314 = vadd.f32 %v222, %v313
    %315 = vmatmul.bf16.gmra.mxu0 %v203
    %v316 = vpop.f32.mrf.mxu0
    %v317 = vadd.f32 %v222, %v316
    %v318 = vpop.f32.mrf.mxu0
    %v319 = vadd.f32 %v222, %v318
    %320 = vdwg.mxu0
    %v321 = vmax.f32 %v282, 0.0
    %v322 = vmax.f32 %v284, 0.0
    %v323 = vmax.f32 %v287, 0.0
    %v324 = vmax.f32 %v289, 0.0
    %v325 = vmax.f32 %v292, 0.0
    %v326 = vmax.f32 %v294, 0.0
    %v327 = vmax.f32 %v297, 0.0
    %v328 = vmax.f32 %v299, 0.0
    %v329 = vmax.f32 %v302, 0.0
    %v330 = vmax.f32 %v304, 0.0
    %v331 = vmax.f32 %v307, 0.0
    %v332 = vmax.f32 %v309, 0.0
    %v333 = vmax.f32 %v312, 0.0
    %v334 = vmax.f32 %v314, 0.0
    %v335 = vmax.f32 %v317, 0.0
    %v336 = vmax.f32 %v319, 0.0
    %v337 = vld [vmem:[%s5] sm:$0x1]
    %v339 = vperm.slane %v337, 0
    %v341 = vmul.f32 %v321, %v339
    %v342 = vmul.f32 %v322, %v339
    %v343 = vmul.f32 %v323, %v339
    %v344 = vmul.f32 %v324, %v339
    %v345 = vmul.f32 %v325, %v339
    %v346 = vmul.f32 %v326, %v339
    %v347 = vmul.f32 %v327, %v339
    %v348 = vmul.f32 %v328, %v339
    %v349 = vmul.f32 %v329, %v339
    %v350 = vmul.f32 %v330, %v339
    %v351 = vmul.f32 %v331, %v339
    %v352 = vmul.f32 %v332, %v339
    %v353 = vmul.f32 %v333, %v339
    %v354 = vmul.f32 %v334, %v339
    %v355 = vmul.f32 %v335, %v339
    %v356 = vmul.f32 %v336, %v339
    %357 = vadd.xlane.f32.xlu0 %v341
    %v358 = vpop.xlane.xlu0 %357
    %359 = vadd.xlane.f32.xlu0 %v342
    %v360 = vpop.xlane.xlu0 %359
    %361 = vadd.xlane.f32.xlu0 %v343
    %v362 = vpop.xlane.xlu0 %361
    %363 = vadd.xlane.f32.xlu0 %v344
    %v364 = vpop.xlane.xlu0 %363
    %365 = vadd.xlane.f32.xlu0 %v345
    %v366 = vpop.xlane.xlu0 %365
    %367 = vadd.xlane.f32.xlu0 %v346
    %v368 = vpop.xlane.xlu0 %367
    %369 = vadd.xlane.f32.xlu0 %v347
    %v370 = vpop.xlane.xlu0 %369
    %371 = vadd.xlane.f32.xlu0 %v348
    %v372 = vpop.xlane.xlu0 %371
    %373 = vadd.xlane.f32.xlu0 %v349
    %v374 = vpop.xlane.xlu0 %373
    %375 = vadd.xlane.f32.xlu0 %v350
    %v376 = vpop.xlane.xlu0 %375
    %377 = vadd.xlane.f32.xlu0 %v351
    %v378 = vpop.xlane.xlu0 %377
    %379 = vadd.xlane.f32.xlu0 %v352
    %v380 = vpop.xlane.xlu0 %379
    %381 = vadd.xlane.f32.xlu0 %v353
    %v382 = vpop.xlane.xlu0 %381
    %383 = vadd.xlane.f32.xlu0 %v354
    %v384 = vpop.xlane.xlu0 %383
    %385 = vadd.xlane.f32.xlu0 %v355
    %v386 = vpop.xlane.xlu0 %385
    %387 = vadd.xlane.f32.xlu0 %v356
    %v388 = vpop.xlane.xlu0 %387
    %v389 = vstv %s61
    %v390 = vadd.f32 %v358, %v389
    %v391 = vadd.f32 %v360, %v389
    %v392 = vadd.f32 %v362, %v389
    %v393 = vadd.f32 %v364, %v389
    %v394 = vadd.f32 %v366, %v389
    %v395 = vadd.f32 %v368, %v389
    %v396 = vadd.f32 %v370, %v389
    %v397 = vadd.f32 %v372, %v389
    %v398 = vadd.f32 %v374, %v389
    %v399 = vadd.f32 %v376, %v389
    %v400 = vadd.f32 %v378, %v389
    %v401 = vadd.f32 %v380, %v389
    %v402 = vadd.f32 %v382, %v389
    %v403 = vadd.f32 %v384, %v389
    %v404 = vadd.f32 %v386, %v389
    %v405 = vadd.f32 %v388, %v389
    %406 = vxpose.xlu0.b32.start [1/16] %v390, 128
    %407 = vxpose.xlu0.b32.cont [2/16] %v391, 128
    %408 = vxpose.xlu0.b32.cont [3/16] %v392, 128
    %409 = vxpose.xlu0.b32.cont [4/16] %v393, 128
    %410 = vxpose.xlu0.b32.cont [5/16] %v394, 128
    %411 = vxpose.xlu0.b32.cont [6/16] %v395, 128
    %412 = vxpose.xlu0.b32.cont [7/16] %v396, 128
    %413 = vxpose.xlu0.b32.cont [8/16] %v397, 128
    %414 = vxpose.xlu0.b32.cont [9/16] %v398, 128
    %415 = vxpose.xlu0.b32.cont [10/16] %v399, 128
    %416 = vxpose.xlu0.b32.cont [11/16] %v400, 128
    %417 = vxpose.xlu0.b32.cont [12/16] %v401, 128
    %418 = vxpose.xlu0.b32.cont [13/16] %v402, 128
    %419 = vxpose.xlu0.b32.cont [14/16] %v403, 128
    %420 = vxpose.xlu0.b32.cont [15/16] %v404, 128
    %421 = vxpose.xlu0.b32.end [16/16] %v405, 128
    %v422 = vpop.trf.xlu0
    %v423 = vpop.trf.xlu0
    %v424 = vpop.trf.xlu0
    %v425 = vpop.trf.xlu0
    %v426 = vpop.trf.xlu0
    %v427 = vpop.trf.xlu0
    %v428 = vpop.trf.xlu0
    %v429 = vpop.trf.xlu0
    %v430 = vpop.trf.xlu0
    %v431 = vpop.trf.xlu0
    %v432 = vpop.trf.xlu0
    %v433 = vpop.trf.xlu0
    %v434 = vpop.trf.xlu0
    %v435 = vpop.trf.xlu0
    %v436 = vpop.trf.xlu0
    %v437 = vpop.trf.xlu0
    %438 = vst [vmem:[#allocation8] sm:$0x1] %v422
    // Predicated region
    $region38: #{tpu_custom_call.1} parent=1 // pred_check
      _
    $region39: #{tpu_custom_call.1} parent=1 // pred_check_branch
      %440 = sbr.rel (0) target = $region41
    $region40: #{tpu_custom_call.1} parent=1 // pred_region
      %442 = vsyncadd [#allocation5], 0
      %s444 = sshll.u32 [#allocation8], 4
      %s445 = int_to_ptr.vmem [resolvable:$true] %s444
      %s446 = sshll.u32 %s7, 4
      %s447 = int_to_ptr.hbm [resolvable:$true] %s446
      %449 = dma.vmem_to_hbm [thread:$0]  %s445, 16, %s447, [#allocation5]
    $region41: #{tpu_custom_call.1} parent=1 // pred_fallthru
      _
    // Predicated region
    $region42: #{tpu_custom_call.1} parent=1 // pred_check
      _
    $region43: #{tpu_custom_call.1} parent=1 // pred_check_branch
      %451 = sbr.rel (0) target = $region45
    $region44: #{tpu_custom_call.1} parent=1 // pred_region
      %453 = dma.done [#allocation5], 16
    $region45: #{tpu_custom_call.1} parent=1 // pred_fallthru
      _
    %454 = vsyncpa [#allocation4], 1
    %455 = vsyncpa [#allocation7], 1
    %456 = vsyncpa [#allocation5], 1

</llo_original>
